<compile_context>
chip_gen: v6e
topology: v6e:2x2x1
jax: 0.10.0
libtpu: 0.0.40
codegen_flags: <defaults>
</compile_context>

<pallas_src>
import jax
import jax.numpy as jnp
from jax.experimental import pallas as pl
from jax.experimental.pallas import tpu as pltpu

NUM_ITEMS = 500   # nn.Embedding(NUM_SAMPLES=500, embedding_dim=1)
EMB_DIM = 1
OUT_DIM = 1


def _gather_linear_kernel(idx_ref, tbl_ref, b_ref, out_ref):
    # idx_ref : SMEM (N,)         int32  -- embedding indices
    # tbl_ref : SMEM (NUM_ITEMS,) f32    -- fused table: table[:, 0] * weight[0, 0]
    # b_ref   : SMEM (1,)         f32    -- linear bias
    # out_ref : SMEM (N,)         f32    -- flattened output (== .view(-1))
    n = out_ref.shape[0]
    b = b_ref[0]
    # N is small and static -> fully unrolled scalar gather; each iteration is one
    # dynamic SMEM load (table[idx[j]]) + one scalar add + one SMEM store.
    for j in range(n):
        out_ref[j] = tbl_ref[idx_ref[j]] + b


def prepare_params(table, weight, bias):
    """Module-init-time fusion: fold nn.Linear(EMB_DIM, OUT_DIM) weight into the
    embedding table.  For EMB_DIM = OUT_DIM = 1:  fused[i] = table[i, 0] * w[0, 0]."""
    fused_table = (table[:, 0] * weight[0, 0]).astype(jnp.float32)   # (NUM_ITEMS,)
    return fused_table, bias.astype(jnp.float32)                     # bias: (OUT_DIM,)


@jax.jit
def linear_embedding_forward(idx, fused_table, bias):
    """idx: (N,) int; fused_table: (NUM_ITEMS,) f32; bias: (1,) f32.
    Returns (N * OUT_DIM,) == (N,) f32, matching `linear(embedding(x)).view(-1)`."""
    n = idx.shape[0]
    smem_spec = pl.BlockSpec(memory_space=pltpu.MemorySpace.SMEM)
    return pl.pallas_call(
        _gather_linear_kernel,
        out_shape=jax.ShapeDtypeStruct((n * OUT_DIM,), jnp.float32),
        in_specs=[
            pl.BlockSpec(memory_space=pltpu.MemorySpace.SMEM),   # indices
            pl.BlockSpec(memory_space=pltpu.MemorySpace.SMEM),   # fused table
            pl.BlockSpec(memory_space=pltpu.MemorySpace.SMEM),   # bias
        ],
        out_specs=smem_spec,
    )(idx.astype(jnp.int32), fused_table, bias)


if __name__ == "__main__":
    key = jax.random.PRNGKey(0)
    k_idx, k_tbl, k_w, k_b = jax.random.split(key, 4)

    N = 8  # small batch of indices

    # Deterministic synthetic parameters (shapes from the module's __init__).
    idx = jax.random.randint(k_idx, (N,), 0, NUM_ITEMS, dtype=jnp.int32)
    table = jax.random.normal(k_tbl, (NUM_ITEMS, EMB_DIM), jnp.float32)   # nn.Embedding weight
    weight = jax.random.normal(k_w, (OUT_DIM, EMB_DIM), jnp.float32)      # nn.Linear weight
    bias = jax.random.normal(k_b, (OUT_DIM,), jnp.float32)                # nn.Linear bias

    # One-time parameter fusion (module init), then the per-call forward.
    fused_table, b = prepare_params(table, weight, bias)
    out = linear_embedding_forward(idx, fused_table, b)
    out = jax.block_until_ready(out)

    # Pure-JAX reference for correctness.
    ref = (table[idx] @ weight.T + bias).reshape(-1)
    assert out.shape == (N * OUT_DIM,)
    assert jnp.allclose(out, ref, atol=1e-5, rtol=1e-5), (out, ref)

    print("KERNEL_OK")
</pallas_src>

<mosaic_0001>
module attributes {stable_mosaic.version = 11 : i64} {
  func.func @_gather_linear_kernel(%arg0: memref<8xi32, #tpu.memory_space<smem>>, %arg1: memref<500xf32, #tpu.memory_space<smem>>, %arg2: memref<1xf32, #tpu.memory_space<smem>>, %arg3: memref<8xf32, #tpu.memory_space<smem>>) attributes {dimension_semantics = [], scalar_prefetch = 0 : i64, scratch_operands = 0 : i64, tpu.core_type = #tpu.core_type<tc>} {
    %c0 = arith.constant 0 : index
    %0 = memref.load %arg2[%c0] : memref<1xf32, #tpu.memory_space<smem>>
    %c0_0 = arith.constant 0 : index
    %1 = memref.load %arg0[%c0_0] : memref<8xi32, #tpu.memory_space<smem>>
    %2 = arith.index_cast %1 : i32 to index
    %3 = memref.load %arg1[%2] : memref<500xf32, #tpu.memory_space<smem>>
    %4 = arith.addf %3, %0 : f32
    %c0_1 = arith.constant 0 : index
    %5 = memref.load %arg3[%c0_1] : memref<8xf32, #tpu.memory_space<smem>>
    memref.store %4, %arg3[%c0_1] : memref<8xf32, #tpu.memory_space<smem>>
    %c1 = arith.constant 1 : index
    %6 = memref.load %arg0[%c1] : memref<8xi32, #tpu.memory_space<smem>>
    %7 = arith.index_cast %6 : i32 to index
    %8 = memref.load %arg1[%7] : memref<500xf32, #tpu.memory_space<smem>>
    %9 = arith.addf %8, %0 : f32
    %c1_2 = arith.constant 1 : index
    %10 = memref.load %arg3[%c1_2] : memref<8xf32, #tpu.memory_space<smem>>
    memref.store %9, %arg3[%c1_2] : memref<8xf32, #tpu.memory_space<smem>>
    %c2 = arith.constant 2 : index
    %11 = memref.load %arg0[%c2] : memref<8xi32, #tpu.memory_space<smem>>
    %12 = arith.index_cast %11 : i32 to index
    %13 = memref.load %arg1[%12] : memref<500xf32, #tpu.memory_space<smem>>
    %14 = arith.addf %13, %0 : f32
    %c2_3 = arith.constant 2 : index
    %15 = memref.load %arg3[%c2_3] : memref<8xf32, #tpu.memory_space<smem>>
    memref.store %14, %arg3[%c2_3] : memref<8xf32, #tpu.memory_space<smem>>
    %c3 = arith.constant 3 : index
    %16 = memref.load %arg0[%c3] : memref<8xi32, #tpu.memory_space<smem>>
    %17 = arith.index_cast %16 : i32 to index
    %18 = memref.load %arg1[%17] : memref<500xf32, #tpu.memory_space<smem>>
    %19 = arith.addf %18, %0 : f32
    %c3_4 = arith.constant 3 : index
    %20 = memref.load %arg3[%c3_4] : memref<8xf32, #tpu.memory_space<smem>>
    memref.store %19, %arg3[%c3_4] : memref<8xf32, #tpu.memory_space<smem>>
    %c4 = arith.constant 4 : index
    %21 = memref.load %arg0[%c4] : memref<8xi32, #tpu.memory_space<smem>>
    %22 = arith.index_cast %21 : i32 to index
    %23 = memref.load %arg1[%22] : memref<500xf32, #tpu.memory_space<smem>>
    %24 = arith.addf %23, %0 : f32
    %c4_5 = arith.constant 4 : index
    %25 = memref.load %arg3[%c4_5] : memref<8xf32, #tpu.memory_space<smem>>
    memref.store %24, %arg3[%c4_5] : memref<8xf32, #tpu.memory_space<smem>>
    %c5 = arith.constant 5 : index
    %26 = memref.load %arg0[%c5] : memref<8xi32, #tpu.memory_space<smem>>
    %27 = arith.index_cast %26 : i32 to index
    %28 = memref.load %arg1[%27] : memref<500xf32, #tpu.memory_space<smem>>
    %29 = arith.addf %28, %0 : f32
    %c5_6 = arith.constant 5 : index
    %30 = memref.load %arg3[%c5_6] : memref<8xf32, #tpu.memory_space<smem>>
    memref.store %29, %arg3[%c5_6] : memref<8xf32, #tpu.memory_space<smem>>
    %c6 = arith.constant 6 : index
    %31 = memref.load %arg0[%c6] : memref<8xi32, #tpu.memory_space<smem>>
    %32 = arith.index_cast %31 : i32 to index
    %33 = memref.load %arg1[%32] : memref<500xf32, #tpu.memory_space<smem>>
    %34 = arith.addf %33, %0 : f32
    %c6_7 = arith.constant 6 : index
    %35 = memref.load %arg3[%c6_7] : memref<8xf32, #tpu.memory_space<smem>>
    memref.store %34, %arg3[%c6_7] : memref<8xf32, #tpu.memory_space<smem>>
    %c7 = arith.constant 7 : index
    %36 = memref.load %arg0[%c7] : memref<8xi32, #tpu.memory_space<smem>>
    %37 = arith.index_cast %36 : i32 to index
    %38 = memref.load %arg1[%37] : memref<500xf32, #tpu.memory_space<smem>>
    %39 = arith.addf %38, %0 : f32
    %c7_8 = arith.constant 7 : index
    %40 = memref.load %arg3[%c7_8] : memref<8xf32, #tpu.memory_space<smem>>
    memref.store %39, %arg3[%c7_8] : memref<8xf32, #tpu.memory_space<smem>>
    return
  }
}

</mosaic_0001>

<llo_original>
// kernel: linear_embedding_forward.1
$region0: #{linear_embedding_forward.1}
  #allocation0 [shape = 'u32[]', space=smem, size = 0x4, offset = 0x4, fixed_abs, tag = 'smem constant byte address 0x4 - core index']
  #allocation1 [shape = 'u32[144,128]{1,0:T(1,128)}', space=vmem, size = 0x12000, scoped, tag = 'internal scratch']
  #allocation2 [shape = 'f32[1]{0:T(128)S(6)}', space=smem, size = 0x200, scoped, tag = 'scoped memory for linear_embedding_forward.1']
  %s0 = inlined_call_operand.vmem [shape: s32[8], index: 0, kind: input, shape index: {}]
  %s1 = inlined_call_operand.hbm [shape: f32[500], index: 1, kind: input, shape index: {}]
  %s2 = inlined_call_operand.<no memory space> [shape: f32[1], index: 2, kind: input, shape index: {}]
  %s3 = inlined_call_operand.hbm [shape: f32[8], index: 3, kind: output, shape index: {}]
  %s4 = sld [smem:[#allocation0]]
  $region30: #{linear_embedding_forward.1} parent=0
    _
  %s6 = ssub.s32 1, %s4
  %s7 = scalar_select 0, %s6, %s4
  %8 = sst [smem:[#allocation2]] %s2
  $region1: #{linear_embedding_forward.1} parent=0
    #allocation3 [shape = 'u8[512]{0}', space=smem, size = 0x200, scoped, tag = 'input window, operand 0, single buffered']
    #allocation4 [shape = 's32[1]{0}', space=sflag, size = 0x4, scoped, tag = 'scoped memory for linear_embedding_forward.1']
    #allocation5 [shape = 's32[1]{0}', space=sflag, size = 0x4, scoped, tag = 'scoped memory for linear_embedding_forward.1']
    #allocation6 [shape = 's32[1]{0}', space=sflag, size = 0x4, scoped, tag = 'scoped memory for linear_embedding_forward.1']
    #allocation7 [shape = 'u8[2048]{0}', space=smem, size = 0x800, scoped, tag = 'input window, operand 1, single buffered']
    #allocation8 [shape = 'u8[512]{0}', space=smem, size = 0x200, scoped, tag = 'output window, operand 0, single buffered']
    %9 = vsyncpa [#allocation6], 0
    %10 = vsyncpa [#allocation4], 0
    %11 = vsyncpa [#allocation5], 0
    // Predicated region
    $region2: #{linear_embedding_forward.1} parent=1 // pred_check
      _
    $region3: #{linear_embedding_forward.1} parent=1 // pred_check_branch
      %13 = sbr.rel (0) target = $region5
    $region4: #{linear_embedding_forward.1} parent=1 // pred_region
      %s15 = ssub.s32 16, 16
      %16 = vsyncadd [#allocation6], %s15
      %s18 = sshll.u32 %s0, 4
      %s19 = int_to_ptr.vmem [resolvable:$true] %s18
      %21 = dma.vmem_to_smem %s19, 16, [#allocation3], [#allocation6]
    $region5: #{linear_embedding_forward.1} parent=1 // pred_fallthru
      _
    // Predicated region
    $region6: #{linear_embedding_forward.1} parent=1 // pred_check
      _
    $region7: #{linear_embedding_forward.1} parent=1 // pred_check_branch
      %23 = sbr.rel (0) target = $region9
    $region8: #{linear_embedding_forward.1} parent=1 // pred_region
      %s25 = ssub.s32 64, 64
      %26 = vsyncadd [#allocation4], %s25
      %29 = dma.hbm_to_smem %s1, 64, [#allocation7], [#allocation4]
    $region9: #{linear_embedding_forward.1} parent=1 // pred_fallthru
      _
    // Predicated region
    $region10: #{linear_embedding_forward.1} parent=1 // pred_check
      _
    $region11: #{linear_embedding_forward.1} parent=1 // pred_check_branch
      %31 = sbr.rel (0) target = $region13
    $region12: #{linear_embedding_forward.1} parent=1 // pred_region
      _
    $region13: #{linear_embedding_forward.1} parent=1 // pred_fallthru
      _
    // Predicated region
    $region14: #{linear_embedding_forward.1} parent=1 // pred_check
      _
    $region15: #{linear_embedding_forward.1} parent=1 // pred_check_branch
      %33 = sbr.rel (0) target = $region17
    $region16: #{linear_embedding_forward.1} parent=1 // pred_region
      %34 = dma.done [#allocation6], 16
    $region17: #{linear_embedding_forward.1} parent=1 // pred_fallthru
      _
    // Predicated region
    $region18: #{linear_embedding_forward.1} parent=1 // pred_check
      _
    $region19: #{linear_embedding_forward.1} parent=1 // pred_check_branch
      %36 = sbr.rel (0) target = $region21
    $region20: #{linear_embedding_forward.1} parent=1 // pred_region
      %37 = dma.done [#allocation4], 64
    $region21: #{linear_embedding_forward.1} parent=1 // pred_fallthru
      _
    %38 = sfence
    %s39 = sld [smem:[#allocation2]]
    %s40 = sld [smem:[#allocation3]]
    %s41 = sld [smem:[#allocation7 + %s40]]
    %s42 = sadd.f32 %s41, %s39
    %s43 = scalar_lea.smem [#allocation8], 0
    %44 = sst [smem:[%s43]] %s42
    %s45 = sld [smem:[#allocation3 + $0x1]]
    %s46 = sld [smem:[#allocation7 + %s45]]
    %s47 = sadd.f32 %s46, %s39
    %s48 = scalar_lea.smem [#allocation8], 1
    %49 = sst [smem:[%s48]] %s47
    %s50 = sld [smem:[#allocation3 + $0x2]]
    %s51 = sld [smem:[#allocation7 + %s50]]
    %s52 = sadd.f32 %s51, %s39
    %s53 = scalar_lea.smem [#allocation8], 2
    %54 = sst [smem:[%s53]] %s52
    %s55 = sld [smem:[#allocation3 + $0x3]]
    %s56 = sld [smem:[#allocation7 + %s55]]
    %s57 = sadd.f32 %s56, %s39
    %s58 = scalar_lea.smem [#allocation8], 3
    %59 = sst [smem:[%s58]] %s57
    %s60 = sld [smem:[#allocation3 + $0x4]]
    %s61 = sld [smem:[#allocation7 + %s60]]
    %s62 = sadd.f32 %s61, %s39
    %s63 = scalar_lea.smem [#allocation8], 4
    %64 = sst [smem:[%s63]] %s62
    %s65 = sld [smem:[#allocation3 + $0x5]]
    %s66 = sld [smem:[#allocation7 + %s65]]
    %s67 = sadd.f32 %s66, %s39
    %s68 = scalar_lea.smem [#allocation8], 5
    %69 = sst [smem:[%s68]] %s67
    %s70 = sld [smem:[#allocation3 + $0x6]]
    %s71 = sld [smem:[#allocation7 + %s70]]
    %s72 = sadd.f32 %s71, %s39
    %s73 = scalar_lea.smem [#allocation8], 6
    %74 = sst [smem:[%s73]] %s72
    %s75 = sld [smem:[#allocation3 + $0x7]]
    %s76 = sld [smem:[#allocation7 + %s75]]
    %s77 = sadd.f32 %s76, %s39
    %s78 = scalar_lea.smem [#allocation8], 7
    %79 = sst [smem:[%s78]] %s77
    // Predicated region
    $region22: #{linear_embedding_forward.1} parent=1 // pred_check
      _
    $region23: #{linear_embedding_forward.1} parent=1 // pred_check_branch
      %81 = sbr.rel (0) target = $region25
    $region24: #{linear_embedding_forward.1} parent=1 // pred_region
      %s83 = ssub.s32 16, 16
      %84 = vsyncadd [#allocation5], %s83
      %87 = dma.smem_to_hbm [#allocation8], 16, %s3, [#allocation5]
    $region25: #{linear_embedding_forward.1} parent=1 // pred_fallthru
      _
    // Predicated region
    $region26: #{linear_embedding_forward.1} parent=1 // pred_check
      _
    $region27: #{linear_embedding_forward.1} parent=1 // pred_check_branch
      %89 = sbr.rel (0) target = $region29
    $region28: #{linear_embedding_forward.1} parent=1 // pred_region
      %90 = dma.done [#allocation5], 16
    $region29: #{linear_embedding_forward.1} parent=1 // pred_fallthru
      _
    %91 = sfence
    %92 = vsyncpa [#allocation4], 1
    %93 = vsyncpa [#allocation5], 1
    %94 = vsyncpa [#allocation6], 1

</llo_original>
